<compile_context>
chip_gen: v5e
topology: v5e:2x2
jax: 0.10.0
libtpu: 0.0.40
codegen_flags: <defaults>
</compile_context>

<pallas_src>
import functools

import jax
import jax.numpy as jnp
from jax import lax
from jax.experimental import pallas as pl
from jax.experimental.pallas import tpu as pltpu


_LANE = 128
_MAX_ROWS_TILE = 32            # cap on batch rows per block (natural layout)
_MAX_STEP_ELEMS = 512 * 1024   # cap on elements touched per grid step (unroll / compile size)


def _cdiv(a, b):
    return -(-a // b)


def _round_up(a, b):
    return _cdiv(a, b) * b


def _vmem_budget():
    """Generation-aware (io_budget, vmem_limit) in bytes (v5e/v6e: 128 MiB VMEM, v7x: 64 MiB)."""
    vmem_bytes = 64 << 20                       # conservative default (v7x-sized)
    try:
        info = pltpu.get_tpu_info()
        for name in ("vmem_capacity_bytes", "vmem_bytes", "vmem_size_bytes"):
            v = getattr(info, name, None)
            if v:
                vmem_bytes = int(v)
                break
    except Exception:
        pass
    io_budget = min(vmem_bytes // 3, 48 << 20)          # double-buffered input budget
    vmem_limit = min(io_budget + (16 << 20), (vmem_bytes * 3) // 4)
    return io_budget, vmem_limit


def _sisdr_kernel(r_ref, e_ref, out_ref, *acc_refs,
                  scaling, zero_mean, clip_min, t_true, tail_valid, lane_width):
    """Streaming SI-SDR: blocks are (rows, T_tile) or (rows, S, T_tile); running sums
    are kept lane-dense in (rows[, S], lane_width) f32 scratch across the T grid axis."""
    srr_ref, see_ref, sre_ref = acc_refs[0], acc_refs[1], acc_refs[2]
    if zero_mean:
        sr_ref, se_ref = acc_refs[3], acc_refs[4]

    three_d = len(r_ref.shape) == 3
    t_block = r_ref.shape[-1]              # static block width along T
    acc_shape = tuple(srr_ref.shape)
    t = pl.program_id(1)
    n_t = pl.num_programs(1)

    @pl.when(t == 0)
    def _init():
        for ref in acc_refs:
            ref[...] = jnp.zeros(ref.shape, jnp.float32)

    def _strip(ref, start):
        if three_d:
            return ref[:, :, start:start + lane_width]
        return ref[:, start:start + lane_width]

    def _accumulate(valid):
        # `valid` is a static Python int: number of in-bounds samples in this block.
        n_full, rem = divmod(valid, lane_width)
        accs = [jnp.zeros(acc_shape, jnp.float32) for _ in acc_refs]

        def _add(i, mask=None):
            rc = _strip(r_ref, i * lane_width).astype(jnp.float32)
            ec = _strip(e_ref, i * lane_width).astype(jnp.float32)
            if mask is not None:           # static (constant) mask on the boundary strip
                rc = jnp.where(mask, rc, 0.0)
                ec = jnp.where(mask, ec, 0.0)
            accs[0] += rc * rc
            accs[1] += ec * ec
            accs[2] += rc * ec
            if zero_mean:
                accs[3] += rc
                accs[4] += ec

        for i in range(n_full):
            _add(i)
        if rem:
            lane = lax.broadcasted_iota(jnp.int32, acc_shape, len(acc_shape) - 1)
            _add(n_full, mask=lane < rem)

        for ref, val in zip(acc_refs, accs):
            ref[...] += val

    if tail_valid == t_block:
        _accumulate(t_block)
    else:
        @pl.when(t < n_t - 1)
        def _body():
            _accumulate(t_block)

        @pl.when(t == n_t - 1)
        def _tail():
            _accumulate(tail_valid)

    @pl.when(t == n_t - 1)
    def _finalize():
        eps = 1e-8
        axes = (1, 2) if three_d else (1,)
        srr = jnp.sum(srr_ref[...], axis=axes, keepdims=True)
        see = jnp.sum(see_ref[...], axis=axes, keepdims=True)
        sre = jnp.sum(sre_ref[...], axis=axes, keepdims=True)
        if zero_mean:
            # Mean subtraction folded in algebraically: Σ(x-m)(y-n) = Σxy - T·m·n.
            mr = jnp.sum(sr_ref[...], axis=axes, keepdims=True) / t_true
            me = jnp.sum(se_ref[...], axis=axes, keepdims=True) / t_true
            srr = srr - t_true * mr * mr
            see = see - t_true * me * me
            sre = sre - t_true * mr * me
        if scaling:
            scale = (sre + eps) / (srr + eps)
        else:
            scale = jnp.ones_like(srr)
        signal = scale * scale * srr
        noise = see - 2.0 * scale * sre + scale * scale * srr
        # The algebraic form can cancel slightly below zero when estimates ≈ scale·refs;
        # the reference (literal sum of squares) is >= 0, so clamp to avoid log10(NaN).
        noise = jnp.maximum(noise, 0.0)
        sdr = -10.0 * jnp.log10(signal / noise + eps)
        if clip_min is not None:
            sdr = jnp.maximum(sdr, clip_min)
        out_ref[...] = sdr


def sisdr_loss(references, estimates, *, scaling=True, reduction="mean",
               zero_mean=True, clip_min=None, weight=1.0):
    """Pallas implementation of SISDRLoss.forward (matches the PyTorch module)."""
    if references.shape != estimates.shape:
        raise ValueError("references and estimates must have the same shape")
    nb = references.shape[0]
    r = references.reshape(nb, -1)      # free (contiguous) reshape; native dtype kept
    e = estimates.reshape(nb, -1)
    T = r.shape[1]

    io_budget, vmem_limit = _vmem_budget()
    isz = r.dtype.itemsize + e.dtype.itemsize
    # dtype-aware sublane packing target (f32: 8, bf16: 16, int8/fp8: 32)
    pack = max(8, 32 // min(r.dtype.itemsize, e.dtype.itemsize))

    # ---- row layout (never pads / copies the inputs in HBM) -----------------
    sub_s = 0
    if nb <= 8:
        for cand in sorted({pack, 8}, reverse=True):
            if T % cand == 0:
                sub_s = cand
                break

    if sub_s:
        # Small batch: split each row into `sub_s` contiguous sub-rows (free reshape)
        # so the packed sublanes are full even for nb == 1.
        S = sub_s
        t_total = T // S
        r_in = r.reshape(nb, S, t_total)
        e_in = e.reshape(nb, S, t_total)
        # Keep >= 2 batch grid steps when nb >= 2 (both v7x TensorCores), while
        # bounding rows-per-block (vreg pressure of the 3-5 f32 accumulators).
        nb_tile = max(1, min(_cdiv(nb, 2), max(1, 64 // S)))
        rows_total = nb_tile * S
        three_d = True
    else:
        # Natural (nb, T) layout: batch rows pack the sublanes.
        S = 1
        t_total = T
        r_in, e_in = r, e
        if nb >= 8:
            nb_tile = 8
            while nb_tile * 4 <= nb and nb_tile < _MAX_ROWS_TILE:
                nb_tile *= 2
        else:
            nb_tile = nb             # tiny-batch fallback (block dim == full dim)
        rows_total = nb_tile
        three_d = False

    grid_b = _cdiv(nb, nb_tile)      # ragged last batch block: OOB rows are discarded

    # ---- T tiling: as large as the (generation-aware) VMEM budget allows ----
    if t_total <= _LANE:
        t_tile = t_total
    else:
        by_vmem = io_budget // (2 * rows_total * isz)    # 2x double-buffered inputs
        by_unroll = _MAX_STEP_ELEMS // rows_total
        t_tile = min(by_vmem, by_unroll, _round_up(t_total, _LANE))
        t_tile = max(_LANE, (t_tile // _LANE) * _LANE)
    grid_t = _cdiv(t_total, t_tile)
    tail_valid = t_total - (grid_t - 1) * t_tile         # static -> tail mask is free
    lane_width = min(_LANE, t_tile)

    if three_d:
        block = (nb_tile, S, t_tile)
        in_index = lambda b, t: (b, 0, t)
        out_block, out_index = (nb_tile, 1, 1), (lambda b, t: (b, 0, 0))
        out_shape = jax.ShapeDtypeStruct((nb, 1, 1), jnp.float32)
        acc_block = (nb_tile, S, lane_width)
    else:
        block = (nb_tile, t_tile)
        in_index = lambda b, t: (b, t)
        out_block, out_index = (nb_tile, 1), (lambda b, t: (b, 0))
        out_shape = jax.ShapeDtypeStruct((nb, 1), jnp.float32)
        acc_block = (nb_tile, lane_width)

    n_acc = 5 if zero_mean else 3    # Σr / Σe only needed for the zero-mean fold
    kernel = functools.partial(
        _sisdr_kernel, scaling=bool(scaling), zero_mean=bool(zero_mean),
        clip_min=clip_min, t_true=float(T),
        tail_valid=int(tail_valid), lane_width=int(lane_width))

    cost = pl.CostEstimate(
        flops=int(8 * nb * T),
        transcendentals=int(nb),
        bytes_accessed=int(nb * T * isz + nb * 4))

    sdr = pl.pallas_call(
        kernel,
        out_shape=out_shape,
        grid_spec=pltpu.PrefetchScalarGridSpec(
            num_scalar_prefetch=0,
            grid=(grid_b, grid_t),                       # (parallel batch, reduction T)
            in_specs=[pl.BlockSpec(block, in_index),
                      pl.BlockSpec(block, in_index)],
            out_specs=pl.BlockSpec(out_block, out_index),
            scratch_shapes=[pltpu.VMEM(acc_block, jnp.float32)
                            for _ in range(n_acc)]),
        compiler_params=pltpu.CompilerParams(
            dimension_semantics=("parallel", "arbitrary"),
            vmem_limit_bytes=int(vmem_limit)),
        cost_estimate=cost,
    )(r_in, e_in)

    sdr = sdr.reshape(nb, 1)          # per-item SDR loss
    # `weight` is stored on the torch module but never applied in forward();
    # keep parity and do not apply it here.
    if reduction == "mean":
        return jnp.mean(sdr)
    if reduction == "sum":
        return jnp.sum(sdr)
    return sdr                        # reduction='none': per-item (nb, 1)


def _sisdr_loss_ref(references, estimates, *, scaling=True, reduction="mean",
                    zero_mean=True, clip_min=None):
    """Pure-JAX reference mirroring the PyTorch forward exactly."""
    eps = 1e-8
    nb = references.shape[0]
    r = references.reshape(nb, -1, 1).astype(jnp.float32)
    e = estimates.reshape(nb, -1, 1).astype(jnp.float32)
    if zero_mean:
        r = r - jnp.mean(r, axis=1, keepdims=True)
        e = e - jnp.mean(e, axis=1, keepdims=True)
    references_projection = jnp.sum(r ** 2, axis=-2) + eps
    references_on_estimates = jnp.sum(e * r, axis=-2) + eps
    scale = (references_on_estimates / references_projection)[:, None, :] if scaling else 1.0
    e_true = scale * r
    e_res = e - e_true
    signal = jnp.sum(e_true ** 2, axis=1)
    noise = jnp.sum(e_res ** 2, axis=1)
    sdr = -10.0 * jnp.log10(signal / noise + eps)
    if clip_min is not None:
        sdr = jnp.maximum(sdr, clip_min)
    if reduction == "mean":
        sdr = jnp.mean(sdr)
    elif reduction == "sum":
        sdr = jnp.sum(sdr)
    return sdr


if __name__ == "__main__":
    key = jax.random.PRNGKey(0)
    ks = jax.random.split(key, 8)

    def check(name, out, ref, rtol=1e-4, atol=1e-4):
        out = jax.block_until_ready(out)
        assert out.shape == jnp.shape(ref), (name, out.shape, jnp.shape(ref))
        assert jnp.allclose(out, ref, rtol=rtol, atol=atol), (name, out, ref)

    # 1) small "audio-like" batch (sub-row path: nb=2 < 8, T=1024), non-zero mean
    refs = jax.random.normal(ks[0], (2, 4, 16, 16), jnp.float32) + 0.5
    ests = refs + 0.1 * jax.random.normal(ks[1], (2, 4, 16, 16), jnp.float32) - 0.2
    check("mean", sisdr_loss(refs, ests), _sisdr_loss_ref(refs, ests))
    check("none", sisdr_loss(refs, ests, reduction="none"),
          _sisdr_loss_ref(refs, ests, reduction="none"))

    # 2) natural-layout path with a ragged T (masked tail strip): nb=16, T=300
    r2 = jax.random.normal(ks[2], (16, 300), jnp.float32)
    e2 = r2 + 0.3 * jax.random.normal(ks[3], (16, 300), jnp.float32)
    check("ragged-T", sisdr_loss(r2, e2), _sisdr_loss_ref(r2, e2))

    # 3) ragged batch (nb=10 -> last 8-row block partially out-of-bounds), sum reduction
    r3 = jax.random.normal(ks[4], (10, 256), jnp.float32)
    e3 = 0.7 * r3 + 0.2 * jax.random.normal(ks[5], (10, 256), jnp.float32)
    check("ragged-nb", sisdr_loss(r3, e3, reduction="sum"),
          _sisdr_loss_ref(r3, e3, reduction="sum"))

    # 4) bf16 inputs (dtype-aware sub-row packing), SNR mode, no zero-mean
    r4 = jax.random.normal(ks[6], (2, 2048), jnp.bfloat16)
    e4 = (r4.astype(jnp.float32)
          + 0.2 * jax.random.normal(ks[7], (2, 2048), jnp.float32)).astype(jnp.bfloat16)
    check("bf16", sisdr_loss(r4, e4, scaling=False, zero_mean=False),
          _sisdr_loss_ref(r4, e4, scaling=False, zero_mean=False),
          rtol=2e-3, atol=2e-3)

    # 5) identical signals + clip_min (exercises the noise >= 0 clamp)
    check("clip", sisdr_loss(refs, refs, clip_min=-30.0),
          _sisdr_loss_ref(refs, refs, clip_min=-30.0))

    print("KERNEL_OK")
</pallas_src>

<mosaic_0001>
module attributes {stable_mosaic.version = 11 : i64} {
  func.func @_sisdr_kernel(%arg0: i32, %arg1: i32, %arg2: memref<1x8x128xf32, #tpu.memory_space<vmem>>, %arg3: memref<1x8x128xf32, #tpu.memory_space<vmem>>, %arg4: memref<1x1x1xf32, #tpu.memory_space<vmem>>, %arg5: memref<1x8x128xf32, #tpu.memory_space<vmem>>, %arg6: memref<1x8x128xf32, #tpu.memory_space<vmem>>, %arg7: memref<1x8x128xf32, #tpu.memory_space<vmem>>, %arg8: memref<1x8x128xf32, #tpu.memory_space<vmem>>, %arg9: memref<1x8x128xf32, #tpu.memory_space<vmem>>) attributes {dimension_semantics = [#tpu.dimension_semantics<parallel>, #tpu.dimension_semantics<arbitrary>], iteration_bounds = array<i64: 2, 1>, scalar_prefetch = 0 : i64, scratch_operands = 5 : i64, tpu.core_type = #tpu.core_type<tc>, window_params = [{transform_indices = @transform_0, window_bounds = array<i64: 1, 8, 128>}, {transform_indices = @transform_1, window_bounds = array<i64: 1, 8, 128>}, {transform_indices = @transform_2, window_bounds = array<i64: 1, 1, 1>}]} {
    %c0_i32 = arith.constant 0 : i32
    %0 = arith.cmpi eq, %arg1, %c0_i32 : i32
    %1 = arith.extui %0 : i1 to i32
    %c0_i32_0 = arith.constant 0 : i32
    %2 = arith.cmpi ne, %1, %c0_i32_0 : i32
    scf.if %2 {
      %cst_42 = arith.constant 0.000000e+00 : f32
      %36 = vector.broadcast %cst_42 : f32 to vector<1x8x128xf32>
      %c0_43 = arith.constant 0 : index
      %c0_44 = arith.constant 0 : index
      %c0_45 = arith.constant 0 : index
      %37 = vector.load %arg5[%c0_43, %c0_44, %c0_45] : memref<1x8x128xf32, #tpu.memory_space<vmem>>, vector<1x8x128xf32>
      tpu.vector_store %arg5[%c0_43, %c0_44, %c0_45], %36 {strides = array<i32>} : memref<1x8x128xf32, #tpu.memory_space<vmem>>, vector<1x8x128xf32>,
      %cst_46 = arith.constant 0.000000e+00 : f32
      %38 = vector.broadcast %cst_46 : f32 to vector<1x8x128xf32>
      %c0_47 = arith.constant 0 : index
      %c0_48 = arith.constant 0 : index
      %c0_49 = arith.constant 0 : index
      %39 = vector.load %arg6[%c0_47, %c0_48, %c0_49] : memref<1x8x128xf32, #tpu.memory_space<vmem>>, vector<1x8x128xf32>
      tpu.vector_store %arg6[%c0_47, %c0_48, %c0_49], %38 {strides = array<i32>} : memref<1x8x128xf32, #tpu.memory_space<vmem>>, vector<1x8x128xf32>,
      %cst_50 = arith.constant 0.000000e+00 : f32
      %40 = vector.broadcast %cst_50 : f32 to vector<1x8x128xf32>
      %c0_51 = arith.constant 0 : index
      %c0_52 = arith.constant 0 : index
      %c0_53 = arith.constant 0 : index
      %41 = vector.load %arg7[%c0_51, %c0_52, %c0_53] : memref<1x8x128xf32, #tpu.memory_space<vmem>>, vector<1x8x128xf32>
      tpu.vector_store %arg7[%c0_51, %c0_52, %c0_53], %40 {strides = array<i32>} : memref<1x8x128xf32, #tpu.memory_space<vmem>>, vector<1x8x128xf32>,
      %cst_54 = arith.constant 0.000000e+00 : f32
      %42 = vector.broadcast %cst_54 : f32 to vector<1x8x128xf32>
      %c0_55 = arith.constant 0 : index
      %c0_56 = arith.constant 0 : index
      %c0_57 = arith.constant 0 : index
      %43 = vector.load %arg8[%c0_55, %c0_56, %c0_57] : memref<1x8x128xf32, #tpu.memory_space<vmem>>, vector<1x8x128xf32>
      tpu.vector_store %arg8[%c0_55, %c0_56, %c0_57], %42 {strides = array<i32>} : memref<1x8x128xf32, #tpu.memory_space<vmem>>, vector<1x8x128xf32>,
      %cst_58 = arith.constant 0.000000e+00 : f32
      %44 = vector.broadcast %cst_58 : f32 to vector<1x8x128xf32>
      %c0_59 = arith.constant 0 : index
      %c0_60 = arith.constant 0 : index
      %c0_61 = arith.constant 0 : index
      %45 = vector.load %arg9[%c0_59, %c0_60, %c0_61] : memref<1x8x128xf32, #tpu.memory_space<vmem>>, vector<1x8x128xf32>
      tpu.vector_store %arg9[%c0_59, %c0_60, %c0_61], %44 {strides = array<i32>} : memref<1x8x128xf32, #tpu.memory_space<vmem>>, vector<1x8x128xf32>,
    } else {
    }
    %cst = arith.constant 0.000000e+00 : f32
    %3 = vector.broadcast %cst : f32 to vector<1x8x128xf32>
    %cst_1 = arith.constant 0.000000e+00 : f32
    %4 = vector.broadcast %cst_1 : f32 to vector<1x8x128xf32>
    %cst_2 = arith.constant 0.000000e+00 : f32
    %5 = vector.broadcast %cst_2 : f32 to vector<1x8x128xf32>
    %cst_3 = arith.constant 0.000000e+00 : f32
    %6 = vector.broadcast %cst_3 : f32 to vector<1x8x128xf32>
    %cst_4 = arith.constant 0.000000e+00 : f32
    %7 = vector.broadcast %cst_4 : f32 to vector<1x8x128xf32>
    %c0 = arith.constant 0 : index
    %c0_5 = arith.constant 0 : index
    %c0_6 = arith.constant 0 : index
    %8 = vector.load %arg2[%c0, %c0_5, %c0_6] : memref<1x8x128xf32, #tpu.memory_space<vmem>>, vector<1x8x128xf32>
    %c0_7 = arith.constant 0 : index
    %c0_8 = arith.constant 0 : index
    %c0_9 = arith.constant 0 : index
    %9 = vector.load %arg3[%c0_7, %c0_8, %c0_9] : memref<1x8x128xf32, #tpu.memory_space<vmem>>, vector<1x8x128xf32>
    %10 = arith.mulf %8, %8 : vector<1x8x128xf32>
    %11 = arith.addf %3, %10 : vector<1x8x128xf32>
    %12 = arith.mulf %9, %9 : vector<1x8x128xf32>
    %13 = arith.addf %4, %12 : vector<1x8x128xf32>
    %14 = arith.mulf %8, %9 : vector<1x8x128xf32>
    %15 = arith.addf %5, %14 : vector<1x8x128xf32>
    %16 = arith.addf %6, %8 : vector<1x8x128xf32>
    %17 = arith.addf %7, %9 : vector<1x8x128xf32>
    %c0_10 = arith.constant 0 : index
    %c0_11 = arith.constant 0 : index
    %c0_12 = arith.constant 0 : index
    %18 = vector.load %arg5[%c0_10, %c0_11, %c0_12] : memref<1x8x128xf32, #tpu.memory_space<vmem>>, vector<1x8x128xf32>
    %19 = arith.addf %18, %11 : vector<1x8x128xf32>
    %c0_13 = arith.constant 0 : index
    %c0_14 = arith.constant 0 : index
    %c0_15 = arith.constant 0 : index
    %20 = vector.load %arg5[%c0_13, %c0_14, %c0_15] : memref<1x8x128xf32, #tpu.memory_space<vmem>>, vector<1x8x128xf32>
    tpu.vector_store %arg5[%c0_13, %c0_14, %c0_15], %19 {strides = array<i32>} : memref<1x8x128xf32, #tpu.memory_space<vmem>>, vector<1x8x128xf32>,
    %c0_16 = arith.constant 0 : index
    %c0_17 = arith.constant 0 : index
    %c0_18 = arith.constant 0 : index
    %21 = vector.load %arg6[%c0_16, %c0_17, %c0_18] : memref<1x8x128xf32, #tpu.memory_space<vmem>>, vector<1x8x128xf32>
    %22 = arith.addf %21, %13 : vector<1x8x128xf32>
    %c0_19 = arith.constant 0 : index
    %c0_20 = arith.constant 0 : index
    %c0_21 = arith.constant 0 : index
    %23 = vector.load %arg6[%c0_19, %c0_20, %c0_21] : memref<1x8x128xf32, #tpu.memory_space<vmem>>, vector<1x8x128xf32>
    tpu.vector_store %arg6[%c0_19, %c0_20, %c0_21], %22 {strides = array<i32>} : memref<1x8x128xf32, #tpu.memory_space<vmem>>, vector<1x8x128xf32>,
    %c0_22 = arith.constant 0 : index
    %c0_23 = arith.constant 0 : index
    %c0_24 = arith.constant 0 : index
    %24 = vector.load %arg7[%c0_22, %c0_23, %c0_24] : memref<1x8x128xf32, #tpu.memory_space<vmem>>, vector<1x8x128xf32>
    %25 = arith.addf %24, %15 : vector<1x8x128xf32>
    %c0_25 = arith.constant 0 : index
    %c0_26 = arith.constant 0 : index
    %c0_27 = arith.constant 0 : index
    %26 = vector.load %arg7[%c0_25, %c0_26, %c0_27] : memref<1x8x128xf32, #tpu.memory_space<vmem>>, vector<1x8x128xf32>
    tpu.vector_store %arg7[%c0_25, %c0_26, %c0_27], %25 {strides = array<i32>} : memref<1x8x128xf32, #tpu.memory_space<vmem>>, vector<1x8x128xf32>,
    %c0_28 = arith.constant 0 : index
    %c0_29 = arith.constant 0 : index
    %c0_30 = arith.constant 0 : index
    %27 = vector.load %arg8[%c0_28, %c0_29, %c0_30] : memref<1x8x128xf32, #tpu.memory_space<vmem>>, vector<1x8x128xf32>
    %28 = arith.addf %27, %16 : vector<1x8x128xf32>
    %c0_31 = arith.constant 0 : index
    %c0_32 = arith.constant 0 : index
    %c0_33 = arith.constant 0 : index
    %29 = vector.load %arg8[%c0_31, %c0_32, %c0_33] : memref<1x8x128xf32, #tpu.memory_space<vmem>>, vector<1x8x128xf32>
    tpu.vector_store %arg8[%c0_31, %c0_32, %c0_33], %28 {strides = array<i32>} : memref<1x8x128xf32, #tpu.memory_space<vmem>>, vector<1x8x128xf32>,
    %c0_34 = arith.constant 0 : index
    %c0_35 = arith.constant 0 : index
    %c0_36 = arith.constant 0 : index
    %30 = vector.load %arg9[%c0_34, %c0_35, %c0_36] : memref<1x8x128xf32, #tpu.memory_space<vmem>>, vector<1x8x128xf32>
    %31 = arith.addf %30, %17 : vector<1x8x128xf32>
    %c0_37 = arith.constant 0 : index
    %c0_38 = arith.constant 0 : index
    %c0_39 = arith.constant 0 : index
    %32 = vector.load %arg9[%c0_37, %c0_38, %c0_39] : memref<1x8x128xf32, #tpu.memory_space<vmem>>, vector<1x8x128xf32>
    tpu.vector_store %arg9[%c0_37, %c0_38, %c0_39], %31 {strides = array<i32>} : memref<1x8x128xf32, #tpu.memory_space<vmem>>, vector<1x8x128xf32>,
    %c0_i32_40 = arith.constant 0 : i32
    %33 = arith.cmpi eq, %arg1, %c0_i32_40 : i32
    %34 = arith.extui %33 : i1 to i32
    %c0_i32_41 = arith.constant 0 : i32
    %35 = arith.cmpi ne, %34, %c0_i32_41 : i32
    scf.if %35 {
      %c0_42 = arith.constant 0 : index
      %c0_43 = arith.constant 0 : index
      %c0_44 = arith.constant 0 : index
      %36 = vector.load %arg5[%c0_42, %c0_43, %c0_44] : memref<1x8x128xf32, #tpu.memory_space<vmem>>, vector<1x8x128xf32>
      %cst_45 = arith.constant dense<0.000000e+00> : vector<1xf32>
      %37 = vector.multi_reduction <add>, %36, %cst_45 [1, 2] : vector<1x8x128xf32> to vector<1xf32>
      %38 = vector.shape_cast %37 : vector<1xf32> to vector<1x1x1xf32>
      %c0_46 = arith.constant 0 : index
      %c0_47 = arith.constant 0 : index
      %c0_48 = arith.constant 0 : index
      %39 = vector.load %arg6[%c0_46, %c0_47, %c0_48] : memref<1x8x128xf32, #tpu.memory_space<vmem>>, vector<1x8x128xf32>
      %cst_49 = arith.constant dense<0.000000e+00> : vector<1xf32>
      %40 = vector.multi_reduction <add>, %39, %cst_49 [1, 2] : vector<1x8x128xf32> to vector<1xf32>
      %41 = vector.shape_cast %40 : vector<1xf32> to vector<1x1x1xf32>
      %c0_50 = arith.constant 0 : index
      %c0_51 = arith.constant 0 : index
      %c0_52 = arith.constant 0 : index
      %42 = vector.load %arg7[%c0_50, %c0_51, %c0_52] : memref<1x8x128xf32, #tpu.memory_space<vmem>>, vector<1x8x128xf32>
      %cst_53 = arith.constant dense<0.000000e+00> : vector<1xf32>
      %43 = vector.multi_reduction <add>, %42, %cst_53 [1, 2] : vector<1x8x128xf32> to vector<1xf32>
      %44 = vector.shape_cast %43 : vector<1xf32> to vector<1x1x1xf32>
      %c0_54 = arith.constant 0 : index
      %c0_55 = arith.constant 0 : index
      %c0_56 = arith.constant 0 : index
      %45 = vector.load %arg8[%c0_54, %c0_55, %c0_56] : memref<1x8x128xf32, #tpu.memory_space<vmem>>, vector<1x8x128xf32>
      %cst_57 = arith.constant dense<0.000000e+00> : vector<1xf32>
      %46 = vector.multi_reduction <add>, %45, %cst_57 [1, 2] : vector<1x8x128xf32> to vector<1xf32>
      %47 = vector.shape_cast %46 : vector<1xf32> to vector<1x1x1xf32>
      %cst_58 = arith.constant 1.024000e+03 : f32
      %48 = vector.broadcast %cst_58 : f32 to vector<1x1x1xf32>
      %49 = arith.divf %47, %48 : vector<1x1x1xf32>
      %c0_59 = arith.constant 0 : index
      %c0_60 = arith.constant 0 : index
      %c0_61 = arith.constant 0 : index
      %50 = vector.load %arg9[%c0_59, %c0_60, %c0_61] : memref<1x8x128xf32, #tpu.memory_space<vmem>>, vector<1x8x128xf32>
      %cst_62 = arith.constant dense<0.000000e+00> : vector<1xf32>
      %51 = vector.multi_reduction <add>, %50, %cst_62 [1, 2] : vector<1x8x128xf32> to vector<1xf32>
      %52 = vector.shape_cast %51 : vector<1xf32> to vector<1x1x1xf32>
      %cst_63 = arith.constant 1.024000e+03 : f32
      %53 = vector.broadcast %cst_63 : f32 to vector<1x1x1xf32>
      %54 = arith.divf %52, %53 : vector<1x1x1xf32>
      %cst_64 = arith.constant 1.024000e+03 : f32
      %55 = vector.broadcast %cst_64 : f32 to vector<1x1x1xf32>
      %56 = arith.mulf %55, %49 : vector<1x1x1xf32>
      %57 = arith.mulf %56, %49 : vector<1x1x1xf32>
      %58 = arith.subf %38, %57 : vector<1x1x1xf32>
      %cst_65 = arith.constant 1.024000e+03 : f32
      %59 = vector.broadcast %cst_65 : f32 to vector<1x1x1xf32>
      %60 = arith.mulf %59, %54 : vector<1x1x1xf32>
      %61 = arith.mulf %60, %54 : vector<1x1x1xf32>
      %62 = arith.subf %41, %61 : vector<1x1x1xf32>
      %cst_66 = arith.constant 1.024000e+03 : f32
      %63 = vector.broadcast %cst_66 : f32 to vector<1x1x1xf32>
      %64 = arith.mulf %63, %49 : vector<1x1x1xf32>
      %65 = arith.mulf %64, %54 : vector<1x1x1xf32>
      %66 = arith.subf %44, %65 : vector<1x1x1xf32>
      %cst_67 = arith.constant 9.99999993E-9 : f32
      %67 = vector.broadcast %cst_67 : f32 to vector<1x1x1xf32>
      %68 = arith.addf %66, %67 : vector<1x1x1xf32>
      %cst_68 = arith.constant 9.99999993E-9 : f32
      %69 = vector.broadcast %cst_68 : f32 to vector<1x1x1xf32>
      %70 = arith.addf %58, %69 : vector<1x1x1xf32>
      %71 = arith.divf %68, %70 : vector<1x1x1xf32>
      %72 = arith.mulf %71, %71 : vector<1x1x1xf32>
      %73 = arith.mulf %72, %58 : vector<1x1x1xf32>
      %cst_69 = arith.constant 2.000000e+00 : f32
      %74 = vector.broadcast %cst_69 : f32 to vector<1x1x1xf32>
      %75 = arith.mulf %74, %71 : vector<1x1x1xf32>
      %76 = arith.mulf %75, %66 : vector<1x1x1xf32>
      %77 = arith.subf %62, %76 : vector<1x1x1xf32>
      %78 = arith.mulf %71, %71 : vector<1x1x1xf32>
      %79 = arith.mulf %78, %58 : vector<1x1x1xf32>
      %80 = arith.addf %77, %79 : vector<1x1x1xf32>
      %cst_70 = arith.constant 0.000000e+00 : f32
      %81 = vector.broadcast %cst_70 : f32 to vector<1x1x1xf32>
      %82 = arith.maximumf %80, %81 : vector<1x1x1xf32>
      %83 = arith.divf %73, %82 : vector<1x1x1xf32>
      %cst_71 = arith.constant 9.99999993E-9 : f32
      %84 = vector.broadcast %cst_71 : f32 to vector<1x1x1xf32>
      %85 = arith.addf %83, %84 : vector<1x1x1xf32>
      %86 = math.log %85 : vector<1x1x1xf32>
      %cst_72 = arith.constant 0.434294492 : f32
      %87 = vector.broadcast %cst_72 : f32 to vector<1x1x1xf32>
      %88 = arith.mulf %86, %87 : vector<1x1x1xf32>
      %cst_73 = arith.constant -1.000000e+01 : f32
      %89 = vector.broadcast %cst_73 : f32 to vector<1x1x1xf32>
      %90 = arith.mulf %89, %88 : vector<1x1x1xf32>
      %c0_74 = arith.constant 0 : index
      %c0_75 = arith.constant 0 : index
      %c0_76 = arith.constant 0 : index
      %91 = vector.load %arg4[%c0_74, %c0_75, %c0_76] : memref<1x1x1xf32, #tpu.memory_space<vmem>>, vector<1x1x1xf32>
      tpu.vector_store %arg4[%c0_74, %c0_75, %c0_76], %90 {strides = array<i32>} : memref<1x1x1xf32, #tpu.memory_space<vmem>>, vector<1x1x1xf32>,
    } else {
    }
    return
  }
  func.func @transform_0(%arg0: i32, %arg1: i32) -> (i32, i32, i32) {
    %c0_i32 = arith.constant 0 : i32
    %c0_i32_0 = arith.constant 0 : i32
    return %arg0, %c0_i32, %arg1 : i32, i32, i32
  }
  func.func @transform_1(%arg0: i32, %arg1: i32) -> (i32, i32, i32) {
    %c0_i32 = arith.constant 0 : i32
    %c0_i32_0 = arith.constant 0 : i32
    return %arg0, %c0_i32, %arg1 : i32, i32, i32
  }
  func.func @transform_2(%arg0: i32, %arg1: i32) -> (i32, i32, i32) {
    %c0_i32 = arith.constant 0 : i32
    %c0_i32_0 = arith.constant 0 : i32
    %c0_i32_1 = arith.constant 0 : i32
    return %arg0, %c0_i32, %c0_i32_0 : i32, i32, i32
  }
}

</mosaic_0001>

<llo_original>
// kernel: tpu_custom_call.1
$region0: #{tpu_custom_call.1}
  #allocation0 [shape = 'u32[]', space=smem, size = 0x4, offset = 0x4, fixed_abs, tag = 'smem constant byte address 0x4 - core index']
  #allocation1 [shape = 'u32[72,128]{1,0:T(1,128)}', space=vmem, size = 0x9000, scoped, tag = 'internal scratch']
  #allocation2 [shape = 'f32[1,8,128]{2,1,0:T(8,128)}', space=vmem, size = 0x1000, scoped, tag = 'scratch operand']
  #allocation3 [shape = 'f32[1,8,128]{2,1,0:T(8,128)}', space=vmem, size = 0x1000, scoped, tag = 'scratch operand']
  #allocation4 [shape = 'f32[1,8,128]{2,1,0:T(8,128)}', space=vmem, size = 0x1000, scoped, tag = 'scratch operand']
  #allocation5 [shape = 'f32[1,8,128]{2,1,0:T(8,128)}', space=vmem, size = 0x1000, scoped, tag = 'scratch operand']
  #allocation6 [shape = 'f32[1,8,128]{2,1,0:T(8,128)}', space=vmem, size = 0x1000, scoped, tag = 'scratch operand']
  %s0 = inlined_call_operand.hbm [shape: f32[2,8,128], index: 0, kind: input, shape index: {}]
  %s1 = inlined_call_operand.hbm [shape: f32[2,8,128], index: 1, kind: input, shape index: {}]
  %s2 = inlined_call_operand.vmem [shape: f32[2,1,1], index: 2, kind: output, shape index: {}]
  %s3 = sld [smem:[#allocation0]]
  $region57: #{tpu_custom_call.1} parent=0
    _
  %s5 = ssub.s32 1, %s3
  %s6 = scalar_select 0, %s5, %s3
  $region1: #{tpu_custom_call.1} parent=0
    #allocation7 [shape = 'u8[8192]{0}', space=vmem, size = 0x2000, scoped, tag = 'input window, operand 0']
    #allocation8 [shape = 's32[2]{0}', space=sflag, size = 0x8, scoped, tag = 'scoped memory for tpu_custom_call.1']
    #allocation9 [shape = 'u8[8192]{0}', space=vmem, size = 0x2000, scoped, tag = 'input window, operand 1']
    #allocation10 [shape = 's32[2]{0}', space=sflag, size = 0x8, scoped, tag = 'scoped memory for tpu_custom_call.1']
    %7 = vsyncpa [#allocation8], 0
    %s8 = scalar_lea.sflag [#allocation8], 1
    %9 = vsyncpa %s8, 0
    %10 = vsyncpa [#allocation10], 0
    %s11 = scalar_lea.sflag [#allocation10], 1
    %12 = vsyncpa %s11, 0
    loop: start=0, step=1, limit=4
    $region2: #{tpu_custom_call.1} parent=1 // loop_pre_header
      _
    $region3: #{tpu_custom_call.1} parent=1 // loop_header
      %s14 = sphi 0, %s18
      %p15 = scmp.ge.s32.totalorder %s14, 4
      %s21 = sphi 0, %s33
      %s22 = sphi 0, %s29
      %s23 = sphi 0, %s21
      %s24 = sphi 0, %s22
      %s25 = sphi 0, %s23
      %s26 = sphi 0, %s24
      %s38 = sphi 0, %s40
      %s41 = sphi 0, %s38
      %s42 = sphi 0, %s41
      %s58 = sphi 0, %s42
      %s66 = sphi 0, %s68
      %s69 = sphi 0, %s66
      %s70 = sphi 0, %s69
      %s86 = sphi 0, %s70
      %s92 = sphi 0, %s94
      %s95 = sphi 0, %s92
      %s96 = sphi 0, %s95
      %s112 = sphi 0, %s96
    $region4: #{tpu_custom_call.1} parent=1 // loop_header_branch
      %17 = sbr.rel (%p15) target = $region8
    $region5: #{tpu_custom_call.1} parent=1 // loop_body
      %s19 = ssub.s32 %s14, 1
      %s20 = ssub.s32 %s14, 2
      %s27 = sadd.s32 1, %s22
      %p28 = scmp.ge.s32.totalorder %s27, 1
      %s29 = scalar_select %p28, 0, %s27
      %s30 = sadd.s32 1, %s21
      %s31 = scalar_select %p28, %s30, %s21
      %p32 = scmp.ge.s32.totalorder %s31, 2
      %s33 = scalar_select %p32, 0, %s31
      %s34 = ssub.s32 %s21, %s33
      %s35 = ssub.s32 %s22, %s29
      %s36 = sor.u32 %s34, %s35
      %p37 = scmp.eq.s32.totalorder %s36, 0
      %s39 = sadd.s32 %s38, 1
      %s40 = scalar_select %p37, %s38, %s39
      %p43 = pneg %p37
      %p44 = scmp.eq.s32.totalorder %s14, 1
      %p45 = por %p43, %p44
      %p46 = scmp.ne.s32.totalorder %s38, %s41
      %p47 = scmp.eq.s32.totalorder %s14, 0
      %p48 = por %p46, %p47
      %p49 = scmp.ne.s32.totalorder %s38, %s41
      %p50 = scmp.eq.s32.totalorder %s19, 1
      %p51 = por %p49, %p50
      %p52 = scmp.ne.s32.totalorder %s41, %s42
      %p53 = scmp.eq.s32.totalorder %s19, 0
      %p54 = por %p52, %p53
      %p55 = scmp.ne.s32.totalorder %s41, %s42
      %p56 = scmp.eq.s32.totalorder %s20, 1
      %p57 = por %p55, %p56
      %p59 = scmp.ne.s32.totalorder %s42, %s58
      %p60 = scmp.eq.s32.totalorder %s20, 0
      %p61 = por %p59, %p60
      %s62 = ssub.s32 %s21, %s33
      %s63 = ssub.s32 %s22, %s29
      %s64 = sor.u32 %s62, %s63
      %p65 = scmp.eq.s32.totalorder %s64, 0
      %s67 = sadd.s32 %s66, 1
      %s68 = scalar_select %p65, %s66, %s67
      %p71 = pneg %p65
      %p72 = scmp.eq.s32.totalorder %s14, 1
      %p73 = por %p71, %p72
      %p74 = scmp.ne.s32.totalorder %s66, %s69
      %p75 = scmp.eq.s32.totalorder %s14, 0
      %p76 = por %p74, %p75
      %p77 = scmp.ne.s32.totalorder %s66, %s69
      %p78 = scmp.eq.s32.totalorder %s19, 1
      %p79 = por %p77, %p78
      %p80 = scmp.ne.s32.totalorder %s69, %s70
      %p81 = scmp.eq.s32.totalorder %s19, 0
      %p82 = por %p80, %p81
      %p83 = scmp.ne.s32.totalorder %s69, %s70
      %p84 = scmp.eq.s32.totalorder %s20, 1
      %p85 = por %p83, %p84
      %p87 = scmp.ne.s32.totalorder %s70, %s86
      %p88 = scmp.eq.s32.totalorder %s20, 0
      %p89 = por %p87, %p88
      %s90 = ssub.s32 %s21, %s33
      %p91 = scmp.eq.s32.totalorder %s90, 0
      %s93 = sadd.s32 %s92, 1
      %s94 = scalar_select %p91, %s92, %s93
      %p97 = pneg %p91
      %p98 = scmp.eq.s32.totalorder %s14, 1
      %p99 = por %p97, %p98
      %p100 = scmp.ne.s32.totalorder %s92, %s95
      %p101 = scmp.eq.s32.totalorder %s14, 0
      %p102 = por %p100, %p101
      %p103 = scmp.ne.s32.totalorder %s92, %s95
      %p104 = scmp.eq.s32.totalorder %s19, 1
      %p105 = por %p103, %p104
      %p106 = scmp.ne.s32.totalorder %s95, %s96
      %p107 = scmp.eq.s32.totalorder %s19, 0
      %p108 = por %p106, %p107
      %p109 = scmp.ne.s32.totalorder %s95, %s96
      %p110 = scmp.eq.s32.totalorder %s20, 1
      %p111 = por %p109, %p110
      %p113 = scmp.ne.s32.totalorder %s96, %s112
      %p114 = scmp.eq.s32.totalorder %s20, 0
      %p115 = por %p113, %p114
      %p116 = scmp.le.s32.totalorder 1, %s14
      %p117 = scmp.lt.s32.totalorder %s14, 3
      %p118 = pnand %p116, %p117
      %p119 = pneg %p118
      // Predicated region
      $region9: #{tpu_custom_call.1} parent=5 // pred_check
        _
      $region10: #{tpu_custom_call.1} parent=5 // pred_check_branch
        %121 = sbr.rel (%p118) target = $region12
      $region11: #{tpu_custom_call.1} parent=5 // pred_region
        %s122 = ssub.s32 %s14, 1
      $region12: #{tpu_custom_call.1} parent=5 // pred_fallthru
        _
      %p123 = scmp.lt.s32.totalorder %s14, 2
      // Predicated region
      $region13: #{tpu_custom_call.1} parent=5 // pred_check
        %p124 = pneg %p123
      $region14: #{tpu_custom_call.1} parent=5 // pred_check_branch
        %126 = sbr.rel (%p124) target = $region16
      $region15: #{tpu_custom_call.1} parent=5 // pred_region
        // Predicated region
        $region17: #{tpu_custom_call.1} parent=15 // pred_check
          %p127 = pneg %p48
        $region18: #{tpu_custom_call.1} parent=15 // pred_check_branch
          %129 = sbr.rel (%p127) target = $region20
        $region19: #{tpu_custom_call.1} parent=15 // pred_region
          %s130 = sand.u32 %s38, 1
          %s131 = scalar_lea.sflag [#allocation8], %s130
          %s132 = sand.u32 %s38, 1
          %s133 = smul.addr %s132, 8
          %s134 = scalar_lea.vmem [#allocation7], %s133
          %136 = vsyncadd %s131, 0
          %s137 = sadd.s32 %s22, %s21
          %s138 = smul.addr %s137, 8
          %s139 = scalar_lea.hbm %s0, %s138
          %s141 = sshll.u32 %s139, 4
          %s142 = int_to_ptr.hbm [resolvable:$true] %s141
          %s143 = sshll.u32 %s134, 4
          %s144 = int_to_ptr.vmem [resolvable:$true] %s143
          %146 = dma.hbm_to_vmem [thread:$0]  %s142, 128, %s144, %s131
        $region20: #{tpu_custom_call.1} parent=15 // pred_fallthru
          _
        // Predicated region
        $region21: #{tpu_custom_call.1} parent=15 // pred_check
          %p147 = pneg %p76
        $region22: #{tpu_custom_call.1} parent=15 // pred_check_branch
          %149 = sbr.rel (%p147) target = $region24
        $region23: #{tpu_custom_call.1} parent=15 // pred_region
          %s150 = sand.u32 %s66, 1
          %s151 = scalar_lea.sflag [#allocation10], %s150
          %s152 = sand.u32 %s66, 1
          %s153 = smul.addr %s152, 8
          %s154 = scalar_lea.vmem [#allocation9], %s153
          %156 = vsyncadd %s151, 0
          %s157 = sadd.s32 %s22, %s21
          %s158 = smul.addr %s157, 8
          %s159 = scalar_lea.hbm %s1, %s158
          %s161 = sshll.u32 %s159, 4
          %s162 = int_to_ptr.hbm [resolvable:$true] %s161
          %s163 = sshll.u32 %s154, 4
          %s164 = int_to_ptr.vmem [resolvable:$true] %s163
          %166 = dma.hbm_to_vmem [thread:$0]  %s162, 128, %s164, %s151
        $region24: #{tpu_custom_call.1} parent=15 // pred_fallthru
          _
      $region16: #{tpu_custom_call.1} parent=5 // pred_fallthru
        _
      %p167 = scmp.le.s32.totalorder 1, %s14
      %p168 = scmp.lt.s32.totalorder %s14, 3
      %p169 = pnand %p167, %p168
      %p170 = pneg %p169
      // Predicated region
      $region25: #{tpu_custom_call.1} parent=5 // pred_check
        _
      $region26: #{tpu_custom_call.1} parent=5 // pred_check_branch
        %172 = sbr.rel (%p169) target = $region28
      $region27: #{tpu_custom_call.1} parent=5 // pred_region
        %s173 = ssub.s32 %s14, 1
        %s174 = sand.u32 %s41, 1
        %s175 = scalar_lea.sflag [#allocation8], %s174
        %s176 = sand.u32 %s41, 1
        %s177 = smul.addr %s176, 8
        %s178 = scalar_lea.vmem [#allocation7], %s177
        // Predicated region
        $region29: #{tpu_custom_call.1} parent=27 // pred_check
          %p179 = pneg %p54
        $region30: #{tpu_custom_call.1} parent=27 // pred_check_branch
          %181 = sbr.rel (%p179) target = $region32
        $region31: #{tpu_custom_call.1} parent=27 // pred_region
          %183 = dma.done %s175, 128
        $region32: #{tpu_custom_call.1} parent=27 // pred_fallthru
          _
        %s184 = sand.u32 %s69, 1
        %s185 = scalar_lea.sflag [#allocation10], %s184
        %s186 = sand.u32 %s69, 1
        %s187 = smul.addr %s186, 8
        %s188 = scalar_lea.vmem [#allocation9], %s187
        // Predicated region
        $region33: #{tpu_custom_call.1} parent=27 // pred_check
          %p189 = pneg %p82
        $region34: #{tpu_custom_call.1} parent=27 // pred_check_branch
          %191 = sbr.rel (%p189) target = $region36
        $region35: #{tpu_custom_call.1} parent=27 // pred_region
          %193 = dma.done %s185, 128
        $region36: #{tpu_custom_call.1} parent=27 // pred_fallthru
          _
        %s194 = sand.u32 %s41, 1
        %s195 = scalar_lea.sflag [#allocation8], %s194
        %s196 = sand.u32 %s41, 1
        %s197 = smul.addr %s196, 8
        %s198 = scalar_lea.vmem [#allocation7], %s197
        %p199 = pneg %p54
        %p200 = pneg %p51
        %s201 = sand.u32 %s69, 1
        %s202 = scalar_lea.sflag [#allocation10], %s201
        %s203 = sand.u32 %s69, 1
        %s204 = smul.addr %s203, 8
        %s205 = scalar_lea.vmem [#allocation9], %s204
        %p206 = pneg %p82
        %p207 = pneg %p79
        %p208 = pneg %p108
        %p209 = pneg %p105
        %p210 = scmp.lt.s32.totalorder %s23, 1
        %s211 = scalar_select %p210, %s23, 1
        %s212 = scalar_lea.vmem %s2, %s211
        %p213 = scmp.lt.s32.totalorder %s23, 1
        %s214 = scalar_select %p213, %s23, 1
        %s215 = scalar_lea.vmem %s2, %s214
        %p216 = scmp.eq.s32.totalorder %s24, 0
        // Predicated region
        $region37: #{tpu_custom_call.1} parent=27 // pred_check
          %p217 = pneg %p216
        $region38: #{tpu_custom_call.1} parent=27 // pred_check_branch
          %219 = sbr.rel (%p217) target = $region40
        $region39: #{tpu_custom_call.1} parent=27 // pred_region
          %220 = vst [vmem:[#allocation2] sm:$0xff] 0.0
          %221 = vst [vmem:[#allocation3] sm:$0xff] 0.0
          %222 = vst [vmem:[#allocation4] sm:$0xff] 0.0
          %223 = vst [vmem:[#allocation5] sm:$0xff] 0.0
          %224 = vst [vmem:[#allocation6] sm:$0xff] 0.0
        $region40: #{tpu_custom_call.1} parent=27 // pred_fallthru
          _
        %v225 = vld [vmem:[%s178] sm:$0xff]
        %v226 = vld [vmem:[%s188] sm:$0xff]
        %v227 = vmul.f32 %v225, %v225
        %v228 = vadd.f32 %v227, 0.0
        %v229 = vmul.f32 %v226, %v226
        %v230 = vadd.f32 %v229, 0.0
        %v231 = vmul.f32 %v225, %v226
        %v232 = vadd.f32 %v231, 0.0
        %v233 = vadd.f32 %v225, 0.0
        %v234 = vadd.f32 %v226, 0.0
        %v235 = vld [vmem:[#allocation2] sm:$0xff]
        %v236 = vadd.f32 %v235, %v228
        %237 = vst [vmem:[#allocation2] sm:$0xff] %v236
        %v238 = vld [vmem:[#allocation3] sm:$0xff]
        %v239 = vadd.f32 %v238, %v230
        %240 = vst [vmem:[#allocation3] sm:$0xff] %v239
        %v241 = vld [vmem:[#allocation4] sm:$0xff]
        %v242 = vadd.f32 %v241, %v232
        %243 = vst [vmem:[#allocation4] sm:$0xff] %v242
        %v244 = vld [vmem:[#allocation5] sm:$0xff]
        %v245 = vadd.f32 %v244, %v233
        %246 = vst [vmem:[#allocation5] sm:$0xff] %v245
        %v247 = vld [vmem:[#allocation6] sm:$0xff]
        %v248 = vadd.f32 %v247, %v234
        %249 = vst [vmem:[#allocation6] sm:$0xff] %v248
        // Predicated region
        $region41: #{tpu_custom_call.1} parent=27 // pred_check
          %p250 = pneg %p216
        $region42: #{tpu_custom_call.1} parent=27 // pred_check_branch
          %252 = sbr.rel (%p250) target = $region44
        $region43: #{tpu_custom_call.1} parent=27 // pred_region
          %v253 = vld [vmem:[#allocation2] sm:$0xff]
          %254 = vadd.xlane.f32.xlu0 %v253
          %v255 = vpop.xlane.xlu0 %254
          %v256 = vrot.slane %v255, 4
          %v257 = vadd.f32 %v255, %v256
          %v258 = vrot.slane %v257, 2
          %v259 = vadd.f32 %v257, %v258
          %v260 = vrot.slane %v259, 1
          %v261 = vadd.f32 %v259, %v260
          %v262 = vld [vmem:[#allocation3] sm:$0xff]
          %263 = vadd.xlane.f32.xlu0 %v262
          %v264 = vpop.xlane.xlu0 %263
          %v265 = vrot.slane %v264, 4
          %v266 = vadd.f32 %v264, %v265
          %v267 = vrot.slane %v266, 2
          %v268 = vadd.f32 %v266, %v267
          %v269 = vrot.slane %v268, 1
          %v270 = vadd.f32 %v268, %v269
          %v271 = vld [vmem:[#allocation4] sm:$0xff]
          %272 = vadd.xlane.f32.xlu0 %v271
          %v273 = vpop.xlane.xlu0 %272
          %v274 = vrot.slane %v273, 4
          %v275 = vadd.f32 %v273, %v274
          %v276 = vrot.slane %v275, 2
          %v277 = vadd.f32 %v275, %v276
          %v278 = vrot.slane %v277, 1
          %v279 = vadd.f32 %v277, %v278
          %v280 = vld [vmem:[#allocation5] sm:$0xff]
          %281 = vadd.xlane.f32.xlu0 %v280
          %v282 = vpop.xlane.xlu0 %281
          %v283 = vrot.slane %v282, 4
          %v284 = vadd.f32 %v282, %v283
          %v285 = vrot.slane %v284, 2
          %v286 = vadd.f32 %v284, %v285
          %v287 = vrot.slane %v286, 1
          %v288 = vadd.f32 %v286, %v287
          %v289 = vrcp.pop 1024.0
          %v290 = vmul.f32 1024.0, %v289
          %v291 = vsub.f32 1.0, %v290
          %v292 = vmul.f32 %v289, %v291
          %v293 = vadd.f32 %v289, %v292
          %vm294 = vweird.f32 %v289
          %v295 = vsel %vm294, %v289, %v293
          %v296 = vmul.f32 %v288, %v295
          %v297 = vld [vmem:[#allocation6] sm:$0xff]
          %298 = vadd.xlane.f32.xlu0 %v297
          %v299 = vpop.xlane.xlu0 %298
          %v300 = vrot.slane %v299, 4
          %v301 = vadd.f32 %v299, %v300
          %v302 = vrot.slane %v301, 2
          %v303 = vadd.f32 %v301, %v302
          %v304 = vrot.slane %v303, 1
          %v305 = vadd.f32 %v303, %v304
          %v306 = vmul.f32 %v305, %v295
          %v307 = vmul.f32 %v296, 1024.0
          %v308 = vmul.f32 %v307, %v296
          %v309 = vsub.f32 %v261, %v308
          %v310 = vmul.f32 %v306, 1024.0
          %v311 = vmul.f32 %v310, %v306
          %v312 = vsub.f32 %v270, %v311
          %v313 = vmul.f32 %v307, %v306
          %v314 = vsub.f32 %v279, %v313
          %v315 = vadd.f32 %v314, 1e-08
          %v316 = vadd.f32 %v309, 1e-08
          %v317 = vrcp.pop %v316
          %v318 = vmul.f32 %v316, %v317
          %v319 = vsub.f32 1.0, %v318
          %v320 = vmul.f32 %v317, %v319
          %v321 = vadd.f32 %v317, %v320
          %vm322 = vweird.f32 %v316
          %vm323 = vweird.f32 %v317
          %vm324 = vmor %vm322, %vm323
          %v325 = vsel %vm324, %v317, %v321
          %v326 = vand.u32 2147483647, %v316
          %vm327 = vcmp.eq.f32.partialorder %v326, 8.507059e+37
          %v328 = vand.u32 %v316, 2147483648
          %v329 = vor.u32 1.1754944e-38, %v328
          %v330 = vsel %vm327, %v329, %v325
          %v331 = vmul.f32 %v315, %v330
          %v332 = vmul.f32 %v331, %v331
          %v333 = vmul.f32 %v332, %v309
          %v334 = vmul.f32 %v331, 2.0
          %v335 = vmul.f32 %v334, %v314
          %v336 = vsub.f32 %v312, %v335
          %v337 = vadd.f32 %v336, %v333
          %v338 = vmax.f32 %v337, 0.0
          %v339 = vrcp.pop %v338
          %v340 = vmul.f32 %v338, %v339
          %v341 = vsub.f32 1.0, %v340
          %v342 = vmul.f32 %v339, %v341
          %v343 = vadd.f32 %v339, %v342
          %vm344 = vweird.f32 %v338
          %vm345 = vweird.f32 %v339
          %vm346 = vmor %vm344, %vm345
          %v347 = vsel %vm346, %v339, %v343
          %v348 = vand.u32 2147483647, %v338
          %vm349 = vcmp.eq.f32.partialorder %v348, 8.507059e+37
          %v350 = vand.u32 %v338, 2147483648
          %v351 = vor.u32 1.1754944e-38, %v350
          %v352 = vsel %vm349, %v351, %v347
          %v353 = vmul.f32 %v333, %v352
          %v354 = vadd.f32 %v353, 1e-08
          %v355 = vlog2.pop %v354
          %v356 = vmul.f32 %v355, 0.6931472
          %v357 = vmul.f32 %v356, 0.4342945
          %v358 = vmul.f32 %v357, -10.0
          %vm359 = vcmask 0
          %360 = vst.msk [vmem:[%s215] sm:$0x1] %vm359, %v358
        $region44: #{tpu_custom_call.1} parent=27 // pred_fallthru
          _
        %p361 = scmp.lt.s32.totalorder %s23, 1
        %s362 = scalar_select %p361, %s23, 1
        %s363 = scalar_lea.vmem %s2, %s362
        // Predicated region
        $region45: #{tpu_custom_call.1} parent=27 // pred_check
          %p364 = pneg %p105
        $region46: #{tpu_custom_call.1} parent=27 // pred_check_branch
          %366 = sbr.rel (%p364) target = $region48
        $region47: #{tpu_custom_call.1} parent=27 // pred_region
          _
        $region48: #{tpu_custom_call.1} parent=27 // pred_fallthru
          _
      $region28: #{tpu_custom_call.1} parent=5 // pred_fallthru
        _
      %p367 = scmp.le.s32.totalorder 2, %s14
      // Predicated region
      $region49: #{tpu_custom_call.1} parent=5 // pred_check
        %p368 = pneg %p367
      $region50: #{tpu_custom_call.1} parent=5 // pred_check_branch
        %370 = sbr.rel (%p368) target = $region52
      $region51: #{tpu_custom_call.1} parent=5 // pred_region
        %s371 = ssub.s32 %s14, 2
        // Predicated region
        $region53: #{tpu_custom_call.1} parent=51 // pred_check
          %p372 = pneg %p111
        $region54: #{tpu_custom_call.1} parent=51 // pred_check_branch
          %374 = sbr.rel (%p372) target = $region56
        $region55: #{tpu_custom_call.1} parent=51 // pred_region
          %p375 = scmp.lt.s32.totalorder %s25, 1
          %s376 = scalar_select %p375, %s25, 1
          %s377 = scalar_lea.vmem %s2, %s376
        $region56: #{tpu_custom_call.1} parent=51 // pred_fallthru
          _
      $region52: #{tpu_custom_call.1} parent=5 // pred_fallthru
        _
    $region6: #{tpu_custom_call.1} parent=1 // loop_footer
      %s18 = sadd.s32 1, %s14
    $region7: #{tpu_custom_call.1} parent=1 // loop_footer_branch
      %13 = sbr.rel target = $region3
    $region8: #{tpu_custom_call.1} parent=1 // loop_exit
      _
    %378 = vsyncpa [#allocation8], 1
    %s379 = scalar_lea.sflag [#allocation8], 1
    %380 = vsyncpa %s379, 1
    %381 = vsyncpa [#allocation10], 1
    %s382 = scalar_lea.sflag [#allocation10], 1
    %383 = vsyncpa %s382, 1

</llo_original>
